<compile_context>
chip_gen: v6e
topology: v6e:2x2x1
jax: 0.10.0
libtpu: 0.0.40
codegen_flags: <defaults>
</compile_context>

<pallas_src>
import math

import jax
import jax.numpy as jnp
from jax.experimental import pallas as pl
from jax.experimental.pallas import tpu as pltpu

_INV_SQRT2 = 0.7071067811865476


def _make_fused_kernel(num_levels):
    """Kernel fusing all up-sampling levels; statically unrolled over levels."""

    def kernel(*refs):
        n_in = 1 + 5 * num_levels
        in_refs, out_refs = refs[:n_in], refs[n_in:]
        x0_ref = in_refs[0]                       # (t0, TM)  coarsest trend tile
        res_refs = in_refs[1:1 + num_levels]      # (t_i, TM) residual tiles
        w_refs = in_refs[1 + num_levels:]         # per level: W1, b1, W2, b2

        cur = x0_ref[...].astype(jnp.float32)
        for i in range(num_levels):               # static Python unroll
            w1 = w_refs[4 * i][...].astype(jnp.float32)       # (t_out, t_in)
            b1 = w_refs[4 * i + 1][...].astype(jnp.float32)   # (t_out, 1)
            w2 = w_refs[4 * i + 2][...].astype(jnp.float32)   # (t_out, t_out)
            b2 = w_refs[4 * i + 3][...].astype(jnp.float32)   # (t_out, 1)

            h = jnp.dot(w1, cur, preferred_element_type=jnp.float32) + b1
            # exact GELU (torch.nn.GELU default, erf-based)
            h = 0.5 * h * (1.0 + jax.lax.erf(h * jnp.float32(_INV_SQRT2)))
            y = jnp.dot(w2, h, preferred_element_type=jnp.float32) + b2

            cur = res_refs[i][...].astype(jnp.float32) + y
            out_refs[i][...] = cur.astype(out_refs[i].dtype)

    return kernel


def _pick_tile_m(M, trend_rows):
    """Lane-axis (B*C) tile size: full width when small, else 128-multiple tile
    keeping the double-buffered trend working set under ~24 MiB (v7x-safe)."""
    if M <= 1024:
        return M
    row_bytes = 4 * trend_rows
    tm = 1024
    while tm > 128 and 2 * tm * row_bytes > (24 << 20):
        tm //= 2
    return tm


def fused_trend_mix(x0, res_list, params):
    """For each level i (chained): cur = res_i + (W2_i @ gelu(W1_i @ cur + b1_i) + b2_i).

    x0:       (t0, M)  coarsest trend, M = B*C on the lane axis
    res_list: per level residual trends, (t_i, M), progressively finer
    params:   per level (W1 (t_out,t_in), b1 (t_out,1), W2 (t_out,t_out), b2 (t_out,1))
    Returns the per-level mixed trends, shapes matching res_list.
    """
    L = len(res_list)
    M = x0.shape[1]
    trend_rows = x0.shape[0] + sum(2 * r.shape[0] for r in res_list)  # x0 + res + out rows
    tm = _pick_tile_m(M, trend_rows)
    grid = (pl.cdiv(M, tm),)

    def trend_spec(t):
        return pl.BlockSpec((t, tm), lambda m: (0, m))

    def const_spec(shape):
        return pl.BlockSpec(shape, lambda m: (0, 0))   # stays resident across grid steps

    in_specs = [trend_spec(x0.shape[0])] + [trend_spec(r.shape[0]) for r in res_list]
    flat_w = []
    for w1, b1, w2, b2 in params:
        for a in (w1, b1, w2, b2):
            in_specs.append(const_spec(a.shape))
            flat_w.append(a)

    out_specs = tuple(trend_spec(r.shape[0]) for r in res_list)
    out_shape = tuple(jax.ShapeDtypeStruct(r.shape, x0.dtype) for r in res_list)

    # Advisory cost estimate + VMEM sizing.
    flops = 0
    transcendentals = 0
    bytes_accessed = 4 * x0.size
    weight_bytes = 0
    for r, (w1, b1, w2, b2) in zip(res_list, params):
        t_out, t_in = w1.shape
        flops += 2 * M * t_in * t_out + 2 * M * t_out * t_out
        transcendentals += M * t_out
        weight_bytes += 4 * (w1.size + b1.size + w2.size + b2.size)
        bytes_accessed += 4 * (2 * r.size)  # residual in + output out
    bytes_accessed += weight_bytes
    cost = pl.CostEstimate(flops=int(flops), transcendentals=int(transcendentals),
                           bytes_accessed=int(bytes_accessed))

    vmem_est = 2 * tm * 4 * trend_rows + 2 * weight_bytes + (4 << 20)
    vmem_limit = int(min(max(vmem_est, 32 << 20), 64 << 20))

    return pl.pallas_call(
        _make_fused_kernel(L),
        out_shape=out_shape,
        grid=grid,
        in_specs=in_specs,
        out_specs=out_specs,
        input_output_aliases={1 + i: i for i in range(L)},  # residual buffer -> output
        compiler_params=pltpu.CompilerParams(
            dimension_semantics=("parallel",),
            vmem_limit_bytes=vmem_limit),
        cost_estimate=cost,
    )(x0, *res_list, *flat_w)


class MultiScaleTrendMixingPallas:
    def __init__(self, history_seq_len, future_seq_len, num_channels, ds_layers, ds_window, key):
        self.history_seq_len = history_seq_len
        self.future_seq_len = future_seq_len
        self.num_channels = num_channels
        self.ds_layers = ds_layers
        self.ds_window = ds_window
        # up_sampling[i] corresponds to l = ds_layers - 1 - i (reversed order, as in PyTorch).
        # Weights kept in torch (out_features, in_features) orientation: kernel computes W @ x^T.
        self.params = []
        for l in reversed(range(ds_layers)):
            in_dim = history_seq_len // ds_window ** (l + 1)
            out_dim = history_seq_len // ds_window ** l
            key, k1, k2, k3, k4 = jax.random.split(key, 5)
            w1 = jax.random.normal(k1, (out_dim, in_dim), jnp.float32) * (1.0 / math.sqrt(in_dim))
            b1 = jax.random.normal(k2, (out_dim,), jnp.float32) * 0.01
            w2 = jax.random.normal(k3, (out_dim, out_dim), jnp.float32) * (1.0 / math.sqrt(out_dim))
            b2 = jax.random.normal(k4, (out_dim,), jnp.float32) * 0.01
            self.params.append((w1, b1, w2, b2))

    def __call__(self, ms_trend_list):
        # ms_trend_list: list of (B, t_l, C), finest first, t_l = history_seq_len // ds_window**l
        length_list = [x.shape[1] for x in ms_trend_list]
        B, _, C = ms_trend_list[0].shape
        M = B * C

        # Coarse-to-fine, (B, t, C) -> (t, B, C) -> (t, B*C): time on sublanes, B*C on lanes.
        rev = ms_trend_list[::-1]
        trends = [jnp.transpose(x, (1, 0, 2)).reshape(x.shape[1], M) for x in rev]
        x0, res_list = trends[0], trends[1:]

        kernel_params = [(w1, b1.reshape(-1, 1), w2, b2.reshape(-1, 1))
                         for (w1, b1, w2, b2) in self.params]

        mixed = fused_trend_mix(x0, res_list, kernel_params)

        # out_trend_list, coarse-to-fine: passthrough of the coarsest + per-level mixed trends.
        out_tM = [x0] + list(mixed)
        out_btc = [jnp.transpose(o.reshape(o.shape[0], B, C), (1, 0, 2)) for o in out_tM]
        out_btc = out_btc[::-1]  # finest first
        return [o[:, :L, :] for o, L in zip(out_btc, length_list)]


def _ref_forward(params, ms_trend_list):
    """Pure-JAX reference mirroring the PyTorch forward exactly (erf GELU)."""
    length_list = [x.shape[1] for x in ms_trend_list]
    trend_list = [jnp.transpose(x, (0, 2, 1)) for x in ms_trend_list]  # (B, C, t)
    rev = trend_list[::-1]
    out_low = rev[0]
    out_high = rev[1]
    outs = [jnp.transpose(out_low, (0, 2, 1))]
    for i in range(len(rev) - 1):
        w1, b1, w2, b2 = params[i]
        h = out_low @ w1.T + b1
        h = 0.5 * h * (1.0 + jax.scipy.special.erf(h / jnp.sqrt(2.0)))
        y = h @ w2.T + b2
        out_high = out_high + y
        out_low = out_high
        if i + 2 <= len(rev) - 1:
            out_high = rev[i + 2]
        outs.append(jnp.transpose(out_low, (0, 2, 1)))
    outs = outs[::-1]
    return [o[:, :L, :] for o, L in zip(outs, length_list)]


if __name__ == "__main__":
    # Small deterministic config: B=2, C=4, history_seq_len=16, ds_window=2, ds_layers=2
    B, C = 2, 4
    history_seq_len, future_seq_len = 16, 16
    ds_layers, ds_window = 2, 2

    key = jax.random.PRNGKey(0)
    key, pkey = jax.random.split(key)
    module = MultiScaleTrendMixingPallas(
        history_seq_len, future_seq_len, C, ds_layers, ds_window, pkey
    )

    # Multi-scale trend inputs: lengths 16, 8, 4 (finest first), each (B, t, C)
    ms_trend_list = []
    for l in range(ds_layers + 1):
        t_l = history_seq_len // ds_window ** l
        key, sub = jax.random.split(key)
        ms_trend_list.append(jax.random.normal(sub, (B, t_l, C), jnp.float32))

    out_list = module(ms_trend_list)
    out_list = [jax.block_until_ready(o) for o in out_list]

    ref_list = _ref_forward(module.params, ms_trend_list)
    for o, r in zip(out_list, ref_list):
        assert o.shape == r.shape, (o.shape, r.shape)
        assert jnp.allclose(o, r, rtol=1e-5, atol=1e-5), float(jnp.max(jnp.abs(o - r)))

    print("KERNEL_OK")
</pallas_src>

<mosaic_0001>
module attributes {stable_mosaic.version = 11 : i64} {
  func.func @kernel(%arg0: i32, %arg1: memref<4x8xf32, #tpu.memory_space<vmem>>, %arg2: memref<8x8xf32, #tpu.memory_space<vmem>>, %arg3: memref<16x8xf32, #tpu.memory_space<vmem>>, %arg4: memref<8x4xf32, #tpu.memory_space<vmem>>, %arg5: memref<8x1xf32, #tpu.memory_space<vmem>>, %arg6: memref<8x8xf32, #tpu.memory_space<vmem>>, %arg7: memref<8x1xf32, #tpu.memory_space<vmem>>, %arg8: memref<16x8xf32, #tpu.memory_space<vmem>>, %arg9: memref<16x1xf32, #tpu.memory_space<vmem>>, %arg10: memref<16x16xf32, #tpu.memory_space<vmem>>, %arg11: memref<16x1xf32, #tpu.memory_space<vmem>>, %arg12: memref<8x8xf32, #tpu.memory_space<vmem>>, %arg13: memref<16x8xf32, #tpu.memory_space<vmem>>) attributes {dimension_semantics = [#tpu.dimension_semantics<parallel>], iteration_bounds = array<i64: 1>, scalar_prefetch = 0 : i64, scratch_operands = 0 : i64, tpu.core_type = #tpu.core_type<tc>, window_params = [{transform_indices = @transform_0, window_bounds = array<i64: 4, 8>}, {transform_indices = @transform_1, window_bounds = array<i64: 8, 8>}, {transform_indices = @transform_2, window_bounds = array<i64: 16, 8>}, {pipeline_mode = #tpu.pipeline_mode<synchronous>, transform_indices = @transform_3, window_bounds = array<i64: 8, 4>}, {pipeline_mode = #tpu.pipeline_mode<synchronous>, transform_indices = @transform_4, window_bounds = array<i64: 8, 1>}, {pipeline_mode = #tpu.pipeline_mode<synchronous>, transform_indices = @transform_5, window_bounds = array<i64: 8, 8>}, {pipeline_mode = #tpu.pipeline_mode<synchronous>, transform_indices = @transform_6, window_bounds = array<i64: 8, 1>}, {pipeline_mode = #tpu.pipeline_mode<synchronous>, transform_indices = @transform_7, window_bounds = array<i64: 16, 8>}, {pipeline_mode = #tpu.pipeline_mode<synchronous>, transform_indices = @transform_8, window_bounds = array<i64: 16, 1>}, {pipeline_mode = #tpu.pipeline_mode<synchronous>, transform_indices = @transform_9, window_bounds = array<i64: 16, 16>}, {pipeline_mode = #tpu.pipeline_mode<synchronous>, transform_indices = @transform_10, window_bounds = array<i64: 16, 1>}, {transform_indices = @transform_11, window_bounds = array<i64: 8, 8>}, {transform_indices = @transform_12, window_bounds = array<i64: 16, 8>}]} {
    %c0 = arith.constant 0 : index
    %c0_0 = arith.constant 0 : index
    %0 = vector.load %arg1[%c0, %c0_0] : memref<4x8xf32, #tpu.memory_space<vmem>>, vector<4x8xf32>
    %c0_1 = arith.constant 0 : index
    %c0_2 = arith.constant 0 : index
    %1 = vector.load %arg4[%c0_1, %c0_2] : memref<8x4xf32, #tpu.memory_space<vmem>>, vector<8x4xf32>
    %c0_3 = arith.constant 0 : index
    %c0_4 = arith.constant 0 : index
    %2 = vector.load %arg5[%c0_3, %c0_4] : memref<8x1xf32, #tpu.memory_space<vmem>>, vector<8x1xf32>
    %c0_5 = arith.constant 0 : index
    %c0_6 = arith.constant 0 : index
    %3 = vector.load %arg6[%c0_5, %c0_6] : memref<8x8xf32, #tpu.memory_space<vmem>>, vector<8x8xf32>
    %c0_7 = arith.constant 0 : index
    %c0_8 = arith.constant 0 : index
    %4 = vector.load %arg7[%c0_7, %c0_8] : memref<8x1xf32, #tpu.memory_space<vmem>>, vector<8x1xf32>
    %cst = arith.constant dense<0.000000e+00> : vector<8x8xf32>
    %5 = tpu.matmul %1, %0, %cst {dimension_numbers = #tpu.dot_dimension_numbers<[1], [0], [0], [1], [0, 0, 1, 1], [], []>} : vector<8x4xf32>, vector<4x8xf32>, vector<8x8xf32> -> vector<8x8xf32>
    %6 = vector.broadcast %2 : vector<8x1xf32> to vector<8x8xf32>
    %7 = arith.addf %5, %6 : vector<8x8xf32>
    %cst_9 = arith.constant 5.000000e-01 : f32
    %8 = vector.broadcast %cst_9 : f32 to vector<8x8xf32>
    %9 = arith.mulf %8, %7 : vector<8x8xf32>
    %cst_10 = arith.constant 0.707106769 : f32
    %10 = vector.broadcast %cst_10 : f32 to vector<8x8xf32>
    %11 = arith.mulf %7, %10 : vector<8x8xf32>
    %12 = math.erf %11 : vector<8x8xf32>
    %cst_11 = arith.constant 1.000000e+00 : f32
    %13 = vector.broadcast %cst_11 : f32 to vector<8x8xf32>
    %14 = arith.addf %13, %12 : vector<8x8xf32>
    %15 = arith.mulf %9, %14 : vector<8x8xf32>
    %cst_12 = arith.constant dense<0.000000e+00> : vector<8x8xf32>
    %16 = tpu.matmul %3, %15, %cst_12 {dimension_numbers = #tpu.dot_dimension_numbers<[1], [0], [0], [1], [0, 0, 1, 1], [], []>} : vector<8x8xf32>, vector<8x8xf32>, vector<8x8xf32> -> vector<8x8xf32>
    %17 = vector.broadcast %4 : vector<8x1xf32> to vector<8x8xf32>
    %18 = arith.addf %16, %17 : vector<8x8xf32>
    %c0_13 = arith.constant 0 : index
    %c0_14 = arith.constant 0 : index
    %19 = vector.load %arg2[%c0_13, %c0_14] : memref<8x8xf32, #tpu.memory_space<vmem>>, vector<8x8xf32>
    %20 = arith.addf %19, %18 : vector<8x8xf32>
    %c0_15 = arith.constant 0 : index
    %c0_16 = arith.constant 0 : index
    %21 = vector.load %arg12[%c0_15, %c0_16] : memref<8x8xf32, #tpu.memory_space<vmem>>, vector<8x8xf32>
    tpu.vector_store %arg12[%c0_15, %c0_16], %20 {strides = array<i32>} : memref<8x8xf32, #tpu.memory_space<vmem>>, vector<8x8xf32>,
    %c0_17 = arith.constant 0 : index
    %c0_18 = arith.constant 0 : index
    %22 = vector.load %arg8[%c0_17, %c0_18] : memref<16x8xf32, #tpu.memory_space<vmem>>, vector<16x8xf32>
    %c0_19 = arith.constant 0 : index
    %c0_20 = arith.constant 0 : index
    %23 = vector.load %arg9[%c0_19, %c0_20] : memref<16x1xf32, #tpu.memory_space<vmem>>, vector<16x1xf32>
    %c0_21 = arith.constant 0 : index
    %c0_22 = arith.constant 0 : index
    %24 = vector.load %arg10[%c0_21, %c0_22] : memref<16x16xf32, #tpu.memory_space<vmem>>, vector<16x16xf32>
    %c0_23 = arith.constant 0 : index
    %c0_24 = arith.constant 0 : index
    %25 = vector.load %arg11[%c0_23, %c0_24] : memref<16x1xf32, #tpu.memory_space<vmem>>, vector<16x1xf32>
    %cst_25 = arith.constant dense<0.000000e+00> : vector<16x8xf32>
    %26 = tpu.matmul %22, %20, %cst_25 {dimension_numbers = #tpu.dot_dimension_numbers<[1], [0], [0], [1], [0, 0, 1, 1], [], []>} : vector<16x8xf32>, vector<8x8xf32>, vector<16x8xf32> -> vector<16x8xf32>
    %27 = vector.broadcast %23 : vector<16x1xf32> to vector<16x8xf32>
    %28 = arith.addf %26, %27 : vector<16x8xf32>
    %cst_26 = arith.constant 5.000000e-01 : f32
    %29 = vector.broadcast %cst_26 : f32 to vector<16x8xf32>
    %30 = arith.mulf %29, %28 : vector<16x8xf32>
    %cst_27 = arith.constant 0.707106769 : f32
    %31 = vector.broadcast %cst_27 : f32 to vector<16x8xf32>
    %32 = arith.mulf %28, %31 : vector<16x8xf32>
    %33 = math.erf %32 : vector<16x8xf32>
    %cst_28 = arith.constant 1.000000e+00 : f32
    %34 = vector.broadcast %cst_28 : f32 to vector<16x8xf32>
    %35 = arith.addf %34, %33 : vector<16x8xf32>
    %36 = arith.mulf %30, %35 : vector<16x8xf32>
    %cst_29 = arith.constant dense<0.000000e+00> : vector<16x8xf32>
    %37 = tpu.matmul %24, %36, %cst_29 {dimension_numbers = #tpu.dot_dimension_numbers<[1], [0], [0], [1], [0, 0, 1, 1], [], []>} : vector<16x16xf32>, vector<16x8xf32>, vector<16x8xf32> -> vector<16x8xf32>
    %38 = vector.broadcast %25 : vector<16x1xf32> to vector<16x8xf32>
    %39 = arith.addf %37, %38 : vector<16x8xf32>
    %c0_30 = arith.constant 0 : index
    %c0_31 = arith.constant 0 : index
    %40 = vector.load %arg3[%c0_30, %c0_31] : memref<16x8xf32, #tpu.memory_space<vmem>>, vector<16x8xf32>
    %41 = arith.addf %40, %39 : vector<16x8xf32>
    %c0_32 = arith.constant 0 : index
    %c0_33 = arith.constant 0 : index
    %42 = vector.load %arg13[%c0_32, %c0_33] : memref<16x8xf32, #tpu.memory_space<vmem>>, vector<16x8xf32>
    tpu.vector_store %arg13[%c0_32, %c0_33], %41 {strides = array<i32>} : memref<16x8xf32, #tpu.memory_space<vmem>>, vector<16x8xf32>,
    return
  }
  func.func @transform_0(%arg0: i32) -> (i32, i32) {
    %c0_i32 = arith.constant 0 : i32
    %c0_i32_0 = arith.constant 0 : i32
    return %c0_i32, %arg0 : i32, i32
  }
  func.func @transform_1(%arg0: i32) -> (i32, i32) {
    %c0_i32 = arith.constant 0 : i32
    %c0_i32_0 = arith.constant 0 : i32
    return %c0_i32, %arg0 : i32, i32
  }
  func.func @transform_2(%arg0: i32) -> (i32, i32) {
    %c0_i32 = arith.constant 0 : i32
    %c0_i32_0 = arith.constant 0 : i32
    return %c0_i32, %arg0 : i32, i32
  }
  func.func @transform_3(%arg0: i32) -> (i32, i32) {
    %c0_i32 = arith.constant 0 : i32
    %c0_i32_0 = arith.constant 0 : i32
    %c0_i32_1 = arith.constant 0 : i32
    return %c0_i32, %c0_i32_0 : i32, i32
  }
  func.func @transform_4(%arg0: i32) -> (i32, i32) {
    %c0_i32 = arith.constant 0 : i32
    %c0_i32_0 = arith.constant 0 : i32
    %c0_i32_1 = arith.constant 0 : i32
    return %c0_i32, %c0_i32_0 : i32, i32
  }
  func.func @transform_5(%arg0: i32) -> (i32, i32) {
    %c0_i32 = arith.constant 0 : i32
    %c0_i32_0 = arith.constant 0 : i32
    %c0_i32_1 = arith.constant 0 : i32
    return %c0_i32, %c0_i32_0 : i32, i32
  }
  func.func @transform_6(%arg0: i32) -> (i32, i32) {
    %c0_i32 = arith.constant 0 : i32
    %c0_i32_0 = arith.constant 0 : i32
    %c0_i32_1 = arith.constant 0 : i32
    return %c0_i32, %c0_i32_0 : i32, i32
  }
  func.func @transform_7(%arg0: i32) -> (i32, i32) {
    %c0_i32 = arith.constant 0 : i32
    %c0_i32_0 = arith.constant 0 : i32
    %c0_i32_1 = arith.constant 0 : i32
    return %c0_i32, %c0_i32_0 : i32, i32
  }
  func.func @transform_8(%arg0: i32) -> (i32, i32) {
    %c0_i32 = arith.constant 0 : i32
    %c0_i32_0 = arith.constant 0 : i32
    %c0_i32_1 = arith.constant 0 : i32
    return %c0_i32, %c0_i32_0 : i32, i32
  }
  func.func @transform_9(%arg0: i32) -> (i32, i32) {
    %c0_i32 = arith.constant 0 : i32
    %c0_i32_0 = arith.constant 0 : i32
    %c0_i32_1 = arith.constant 0 : i32
    return %c0_i32, %c0_i32_0 : i32, i32
  }
  func.func @transform_10(%arg0: i32) -> (i32, i32) {
    %c0_i32 = arith.constant 0 : i32
    %c0_i32_0 = arith.constant 0 : i32
    %c0_i32_1 = arith.constant 0 : i32
    return %c0_i32, %c0_i32_0 : i32, i32
  }
  func.func @transform_11(%arg0: i32) -> (i32, i32) {
    %c0_i32 = arith.constant 0 : i32
    %c0_i32_0 = arith.constant 0 : i32
    return %c0_i32, %arg0 : i32, i32
  }
  func.func @transform_12(%arg0: i32) -> (i32, i32) {
    %c0_i32 = arith.constant 0 : i32
    %c0_i32_0 = arith.constant 0 : i32
    return %c0_i32, %arg0 : i32, i32
  }
}

</mosaic_0001>

<llo_original>
// kernel: tpu_custom_call.1
$region0: #{tpu_custom_call.1}
  #allocation0 [shape = 'u32[]', space=smem, size = 0x4, offset = 0x4, fixed_abs, tag = 'smem constant byte address 0x4 - core index']
  #allocation1 [shape = 'u32[144,128]{1,0:T(1,128)}', space=vmem, size = 0x12000, scoped, tag = 'internal scratch']
  %s0 = inlined_call_operand.vmem [shape: f32[4,8], index: 0, kind: input, shape index: {}]
  %s1 = inlined_call_operand.vmem [shape: f32[8,8], index: 1, kind: input, shape index: {}, may-alias: {1,11}]
  %s2 = inlined_call_operand.vmem [shape: f32[16,8], index: 2, kind: input, shape index: {}, may-alias: {2,12}]
  %s3 = inlined_call_operand.vmem [shape: f32[8,4], index: 3, kind: input, shape index: {}]
  %s4 = inlined_call_operand.vmem [shape: f32[8,1], index: 4, kind: input, shape index: {}]
  %s5 = inlined_call_operand.vmem [shape: f32[8,8], index: 5, kind: input, shape index: {}]
  %s6 = inlined_call_operand.vmem [shape: f32[8,1], index: 6, kind: input, shape index: {}]
  %s7 = inlined_call_operand.vmem [shape: f32[16,8], index: 7, kind: input, shape index: {}]
  %s8 = inlined_call_operand.vmem [shape: f32[16,1], index: 8, kind: input, shape index: {}]
  %s9 = inlined_call_operand.vmem [shape: f32[16,16], index: 9, kind: input, shape index: {}]
  %s10 = inlined_call_operand.vmem [shape: f32[16,1], index: 10, kind: input, shape index: {}]
  %s11 = inlined_call_operand.vmem [shape: f32[8,8], index: 11, kind: output, shape index: {0}, may-alias: {1,11}]
  %s12 = inlined_call_operand.vmem [shape: f32[16,8], index: 12, kind: output, shape index: {1}, may-alias: {2,12}]
  %13 = xla_tuple %s11, %s12
  %s14 = sld [smem:[#allocation0]]
  $region62: #{tpu_custom_call.1} parent=0
    _
  %s16 = ssub.s32 1, %s14
  %s17 = scalar_select 0, %s16, %s14
  // Predicated region
  $region2: #{tpu_custom_call.1} parent=0 // pred_check
    _
  $region3: #{tpu_custom_call.1} parent=0 // pred_check_branch
    %19 = sbr.rel (0) target = $region5
  $region4: #{tpu_custom_call.1} parent=0 // pred_region
    _
  $region5: #{tpu_custom_call.1} parent=0 // pred_fallthru
    _
  // Predicated region
  $region6: #{tpu_custom_call.1} parent=0 // pred_check
    _
  $region7: #{tpu_custom_call.1} parent=0 // pred_check_branch
    %21 = sbr.rel (0) target = $region9
  $region8: #{tpu_custom_call.1} parent=0 // pred_region
    _
  $region9: #{tpu_custom_call.1} parent=0 // pred_fallthru
    _
  // Predicated region
  $region10: #{tpu_custom_call.1} parent=0 // pred_check
    _
  $region11: #{tpu_custom_call.1} parent=0 // pred_check_branch
    %23 = sbr.rel (0) target = $region13
  $region12: #{tpu_custom_call.1} parent=0 // pred_region
    _
  $region13: #{tpu_custom_call.1} parent=0 // pred_fallthru
    _
  // Predicated region
  $region14: #{tpu_custom_call.1} parent=0 // pred_check
    _
  $region15: #{tpu_custom_call.1} parent=0 // pred_check_branch
    %25 = sbr.rel (0) target = $region17
  $region16: #{tpu_custom_call.1} parent=0 // pred_region
    _
  $region17: #{tpu_custom_call.1} parent=0 // pred_fallthru
    _
  // Predicated region
  $region18: #{tpu_custom_call.1} parent=0 // pred_check
    _
  $region19: #{tpu_custom_call.1} parent=0 // pred_check_branch
    %27 = sbr.rel (0) target = $region21
  $region20: #{tpu_custom_call.1} parent=0 // pred_region
    _
  $region21: #{tpu_custom_call.1} parent=0 // pred_fallthru
    _
  // Predicated region
  $region22: #{tpu_custom_call.1} parent=0 // pred_check
    _
  $region23: #{tpu_custom_call.1} parent=0 // pred_check_branch
    %29 = sbr.rel (0) target = $region25
  $region24: #{tpu_custom_call.1} parent=0 // pred_region
    _
  $region25: #{tpu_custom_call.1} parent=0 // pred_fallthru
    _
  // Predicated region
  $region26: #{tpu_custom_call.1} parent=0 // pred_check
    _
  $region27: #{tpu_custom_call.1} parent=0 // pred_check_branch
    %31 = sbr.rel (0) target = $region29
  $region28: #{tpu_custom_call.1} parent=0 // pred_region
    _
  $region29: #{tpu_custom_call.1} parent=0 // pred_fallthru
    _
  // Predicated region
  $region30: #{tpu_custom_call.1} parent=0 // pred_check
    _
  $region31: #{tpu_custom_call.1} parent=0 // pred_check_branch
    %33 = sbr.rel (0) target = $region33
  $region32: #{tpu_custom_call.1} parent=0 // pred_region
    _
  $region33: #{tpu_custom_call.1} parent=0 // pred_fallthru
    _
  // Predicated region
  $region34: #{tpu_custom_call.1} parent=0 // pred_check
    _
  $region35: #{tpu_custom_call.1} parent=0 // pred_check_branch
    %35 = sbr.rel (0) target = $region37
  $region36: #{tpu_custom_call.1} parent=0 // pred_region
    _
  $region37: #{tpu_custom_call.1} parent=0 // pred_fallthru
    _
  // Predicated region
  $region38: #{tpu_custom_call.1} parent=0 // pred_check
    _
  $region39: #{tpu_custom_call.1} parent=0 // pred_check_branch
    %37 = sbr.rel (0) target = $region41
  $region40: #{tpu_custom_call.1} parent=0 // pred_region
    _
  $region41: #{tpu_custom_call.1} parent=0 // pred_fallthru
    _
  // Predicated region
  $region42: #{tpu_custom_call.1} parent=0 // pred_check
    _
  $region43: #{tpu_custom_call.1} parent=0 // pred_check_branch
    %39 = sbr.rel (0) target = $region45
  $region44: #{tpu_custom_call.1} parent=0 // pred_region
    _
  $region45: #{tpu_custom_call.1} parent=0 // pred_fallthru
    _
  %v40 = vld [vmem:[%s0] sm:$0xf]
  %v41 = vld [vmem:[%s3] sm:$0xff]
  %v42 = vld [vmem:[%s4] sm:$0xff]
  %v43 = vld [vmem:[%s5] sm:$0xff]
  %v44 = vld [vmem:[%s6] sm:$0xff]
  %46 = vset.pattern.permute.xlu0 0
  %47 = vperm.xlu0 %46, %v42
  %v48 = vpop.permute.xlu0 %47
  %vm50 = vcmask 31744
  %v52 = vsel %vm50, %v41, 0
  %vm54 = vcmask 1043456
  %v56 = vsel %vm54, %v40, 0
  %58 = vmatprep.subr.mxu0 0.0
  %59 = vmatpush1.msra.mxu0 0.0
  %60 = vmatprep.subr.mxu0 0.0
  %61 = vmatpush1.msra.mxu0 0.0
  %62 = vmatprep.subr.mxu0 0.0
  %63 = vmatpush1.msra.mxu0 0.0
  %64 = vmatprep.subr.mxu0 0.0
  %65 = vmatpush1.msra.mxu0 0.0
  %66 = vmatprep.subr.mxu0 0.0
  %67 = vmatpush1.msra.mxu0 0.0
  %68 = vmatprep.subr.mxu0 0.0
  %69 = vmatpush1.msra.mxu0 0.0
  %70 = vmatprep.subr.mxu0 0.0
  %71 = vmatpush1.msra.mxu0 0.0
  %72 = vmatprep.subr.mxu0 0.0
  %73 = vmatpush1.msra.mxu0 0.0
  %74 = vmatprep.subr.mxu0 0.0
  %75 = vmatpush1.msra.mxu0 0.0
  %76 = vmatprep.subr.mxu0 0.0
  %77 = vmatpush1.msra.mxu0 0.0
  %78 = vmatprep.subr.mxu0 0.0
  %79 = vmatpush1.msra.mxu0 0.0
  %80 = vmatprep.subr.mxu0 0.0
  %81 = vmatpush1.msra.mxu0 0.0
  %82 = vmatprep.subr.mxu0 0.0
  %83 = vmatpush1.msra.mxu0 0.0
  %84 = vmatprep.subr.mxu0 0.0
  %85 = vmatpush1.msra.mxu0 0.0
  %86 = vmatprep.subr.mxu0 0.0
  %87 = vmatpush1.msra.mxu0 0.0
  %88 = vmatprep.subr.mxu0 0.0
  %89 = vmatpush1.msra.mxu0 %v56
  %90 = vmatprep.subr.mxu0 0.0
  %91 = vmatpush2.msra.mxu0 0.0
  %92 = vmatprep.subr.mxu0 0.0
  %93 = vmatpush2.msra.mxu0 0.0
  %94 = vmatprep.subr.mxu0 0.0
  %95 = vmatpush2.msra.mxu0 0.0
  %96 = vmatprep.subr.mxu0 0.0
  %97 = vmatpush2.msra.mxu0 0.0
  %98 = vmatprep.subr.mxu0 0.0
  %99 = vmatpush2.msra.mxu0 0.0
  %100 = vmatprep.subr.mxu0 0.0
  %101 = vmatpush2.msra.mxu0 0.0
  %102 = vmatprep.subr.mxu0 0.0
  %103 = vmatpush2.msra.mxu0 0.0
  %104 = vmatprep.subr.mxu0 0.0
  %105 = vmatpush2.msra.mxu0 0.0
  %106 = vmatprep.subr.mxu0 0.0
  %107 = vmatpush2.msra.mxu0 0.0
  %108 = vmatprep.subr.mxu0 0.0
  %109 = vmatpush2.msra.mxu0 0.0
  %110 = vmatprep.subr.mxu0 0.0
  %111 = vmatpush2.msra.mxu0 0.0
  %112 = vmatprep.subr.mxu0 0.0
  %113 = vmatpush2.msra.mxu0 0.0
  %114 = vmatprep.subr.mxu0 0.0
  %115 = vmatpush2.msra.mxu0 0.0
  %116 = vmatprep.subr.mxu0 0.0
  %117 = vmatpush2.msra.mxu0 0.0
  %118 = vmatprep.subr.mxu0 0.0
  %119 = vmatpush2.msra.mxu0 0.0
  %120 = vmatprep.subr.mxu0 0.0
  %121 = vmatpush2.msra.mxu0 0.0
  %122 = vmatprep.mubr.f32.mxu0 0.0
  %123 = vmatmul.mubr.f32.gmra.mxu0 %v52
  %v124 = vpop.f32.mrf.mxu0
  %v125 = vadd.f32 %v48, %v124
  %v126 = vpop.f32.mrf.mxu0
  %127 = vdwg.mxu0
  %v128 = vmul.f32 %v125, 0.5
  %v129 = vmul.f32 %v125, 0.70710677
  %v130 = verf.f32.pop %v129
  %v131 = vadd.f32 %v130, 1.0
  %v132 = vmul.f32 %v128, %v131
  %134 = vset.pattern.permute.xlu0 0
  %135 = vperm.xlu0 %134, %v44
  %v136 = vpop.permute.xlu0 %135
  %vm138 = vcmask 64512
  %v140 = vsel %vm138, %v43, 0
  %142 = vmatprep.subr.mxu0 0.0
  %143 = vmatpush1.msra.mxu0 0.0
  %144 = vmatprep.subr.mxu0 0.0
  %145 = vmatpush1.msra.mxu0 0.0
  %146 = vmatprep.subr.mxu0 0.0
  %147 = vmatpush1.msra.mxu0 0.0
  %148 = vmatprep.subr.mxu0 0.0
  %149 = vmatpush1.msra.mxu0 0.0
  %150 = vmatprep.subr.mxu0 0.0
  %151 = vmatpush1.msra.mxu0 0.0
  %152 = vmatprep.subr.mxu0 0.0
  %153 = vmatpush1.msra.mxu0 0.0
  %154 = vmatprep.subr.mxu0 0.0
  %155 = vmatpush1.msra.mxu0 0.0
  %156 = vmatprep.subr.mxu0 0.0
  %157 = vmatpush1.msra.mxu0 0.0
  %158 = vmatprep.subr.mxu0 0.0
  %159 = vmatpush1.msra.mxu0 0.0
  %160 = vmatprep.subr.mxu0 0.0
  %161 = vmatpush1.msra.mxu0 0.0
  %162 = vmatprep.subr.mxu0 0.0
  %163 = vmatpush1.msra.mxu0 0.0
  %164 = vmatprep.subr.mxu0 0.0
  %165 = vmatpush1.msra.mxu0 0.0
  %166 = vmatprep.subr.mxu0 0.0
  %167 = vmatpush1.msra.mxu0 0.0
  %168 = vmatprep.subr.mxu0 0.0
  %169 = vmatpush1.msra.mxu0 0.0
  %170 = vmatprep.subr.mxu0 0.0
  %171 = vmatpush1.msra.mxu0 0.0
  %172 = vmatprep.subr.mxu0 0.0
  %173 = vmatpush1.msra.mxu0 %v132
  %174 = vmatprep.subr.mxu0 0.0
  %175 = vmatpush2.msra.mxu0 0.0
  %176 = vmatprep.subr.mxu0 0.0
  %177 = vmatpush2.msra.mxu0 0.0
  %178 = vmatprep.subr.mxu0 0.0
  %179 = vmatpush2.msra.mxu0 0.0
  %180 = vmatprep.subr.mxu0 0.0
  %181 = vmatpush2.msra.mxu0 0.0
  %182 = vmatprep.subr.mxu0 0.0
  %183 = vmatpush2.msra.mxu0 0.0
  %184 = vmatprep.subr.mxu0 0.0
  %185 = vmatpush2.msra.mxu0 0.0
  %186 = vmatprep.subr.mxu0 0.0
  %187 = vmatpush2.msra.mxu0 0.0
  %188 = vmatprep.subr.mxu0 0.0
  %189 = vmatpush2.msra.mxu0 0.0
  %190 = vmatprep.subr.mxu0 0.0
  %191 = vmatpush2.msra.mxu0 0.0
  %192 = vmatprep.subr.mxu0 0.0
  %193 = vmatpush2.msra.mxu0 0.0
  %194 = vmatprep.subr.mxu0 0.0
  %195 = vmatpush2.msra.mxu0 0.0
  %196 = vmatprep.subr.mxu0 0.0
  %197 = vmatpush2.msra.mxu0 0.0
  %198 = vmatprep.subr.mxu0 0.0
  %199 = vmatpush2.msra.mxu0 0.0
  %200 = vmatprep.subr.mxu0 0.0
  %201 = vmatpush2.msra.mxu0 0.0
  %202 = vmatprep.subr.mxu0 0.0
  %203 = vmatpush2.msra.mxu0 0.0
  %204 = vmatprep.subr.mxu0 0.0
  %205 = vmatpush2.msra.mxu0 0.0
  %206 = vmatprep.mubr.f32.mxu0 0.0
  %207 = vmatmul.mubr.f32.gmra.mxu0 %v140
  %v208 = vpop.f32.mrf.mxu0
  %v209 = vadd.f32 %v136, %v208
  %v210 = vpop.f32.mrf.mxu0
  %211 = vdwg.mxu0
  %v212 = vld [vmem:[%s1] sm:$0xff]
  %v213 = vadd.f32 %v212, %v209
  %214 = vst.msk [vmem:[%s11] sm:$0xff] %vm138, %v213
  %v215 = vld [vmem:[%s7] sm:$0xff]
  %v216 = vld [vmem:[%s7 + $0x8] sm:$0xff]
  %v217 = vld [vmem:[%s8] sm:$0xff]
  %v218 = vld [vmem:[%s8 + $0x8] sm:$0xff]
  %v219 = vld [vmem:[%s9] sm:$0xff]
  %v220 = vld [vmem:[%s9 + $0x8] sm:$0xff]
  %v221 = vld [vmem:[%s10] sm:$0xff]
  %v222 = vld [vmem:[%s10 + $0x8] sm:$0xff]
  %224 = vset.pattern.permute.xlu0 0
  %225 = vperm.xlu0 %224, %v217
  %v226 = vpop.permute.xlu0 %225
  %229 = vset.pattern.permute.xlu0 0
  %230 = vperm.xlu0 %229, %v218
  %v231 = vpop.permute.xlu0 %230
  %v234 = vsel %vm138, %v215, 0
  %v237 = vsel %vm138, %v216, 0
  %239 = vmatprep.subr.mxu0 0.0
  %240 = vmatpush1.msra.mxu0 0.0
  %241 = vmatprep.subr.mxu0 0.0
  %242 = vmatpush1.msra.mxu0 0.0
  %243 = vmatprep.subr.mxu0 0.0
  %244 = vmatpush1.msra.mxu0 0.0
  %245 = vmatprep.subr.mxu0 0.0
  %246 = vmatpush1.msra.mxu0 0.0
  %247 = vmatprep.subr.mxu0 0.0
  %248 = vmatpush1.msra.mxu0 0.0
  %249 = vmatprep.subr.mxu0 0.0
  %250 = vmatpush1.msra.mxu0 0.0
  %251 = vmatprep.subr.mxu0 0.0
  %252 = vmatpush1.msra.mxu0 0.0
  %253 = vmatprep.subr.mxu0 0.0
  %254 = vmatpush1.msra.mxu0 0.0
  %255 = vmatprep.subr.mxu0 0.0
  %256 = vmatpush1.msra.mxu0 0.0
  %257 = vmatprep.subr.mxu0 0.0
  %258 = vmatpush1.msra.mxu0 0.0
  %259 = vmatprep.subr.mxu0 0.0
  %260 = vmatpush1.msra.mxu0 0.0
  %261 = vmatprep.subr.mxu0 0.0
  %262 = vmatpush1.msra.mxu0 0.0
  %263 = vmatprep.subr.mxu0 0.0
  %264 = vmatpush1.msra.mxu0 0.0
  %265 = vmatprep.subr.mxu0 0.0
  %266 = vmatpush1.msra.mxu0 0.0
  %267 = vmatprep.subr.mxu0 0.0
  %268 = vmatpush1.msra.mxu0 0.0
  %269 = vmatprep.subr.mxu0 0.0
  %270 = vmatpush1.msra.mxu0 %v213
  %271 = vmatprep.subr.mxu0 0.0
  %272 = vmatpush2.msra.mxu0 0.0
  %273 = vmatprep.subr.mxu0 0.0
  %274 = vmatpush2.msra.mxu0 0.0
  %275 = vmatprep.subr.mxu0 0.0
  %276 = vmatpush2.msra.mxu0 0.0
  %277 = vmatprep.subr.mxu0 0.0
  %278 = vmatpush2.msra.mxu0 0.0
  %279 = vmatprep.subr.mxu0 0.0
  %280 = vmatpush2.msra.mxu0 0.0
  %281 = vmatprep.subr.mxu0 0.0
  %282 = vmatpush2.msra.mxu0 0.0
  %283 = vmatprep.subr.mxu0 0.0
  %284 = vmatpush2.msra.mxu0 0.0
  %285 = vmatprep.subr.mxu0 0.0
  %286 = vmatpush2.msra.mxu0 0.0
  %287 = vmatprep.subr.mxu0 0.0
  %288 = vmatpush2.msra.mxu0 0.0
  %289 = vmatprep.subr.mxu0 0.0
  %290 = vmatpush2.msra.mxu0 0.0
  %291 = vmatprep.subr.mxu0 0.0
  %292 = vmatpush2.msra.mxu0 0.0
  %293 = vmatprep.subr.mxu0 0.0
  %294 = vmatpush2.msra.mxu0 0.0
  %295 = vmatprep.subr.mxu0 0.0
  %296 = vmatpush2.msra.mxu0 0.0
  %297 = vmatprep.subr.mxu0 0.0
  %298 = vmatpush2.msra.mxu0 0.0
  %299 = vmatprep.subr.mxu0 0.0
  %300 = vmatpush2.msra.mxu0 0.0
  %301 = vmatprep.subr.mxu0 0.0
  %302 = vmatpush2.msra.mxu0 0.0
  %303 = vmatprep.mubr.f32.mxu0 0.0
  %304 = vmatmul.mubr.f32.gmra.mxu0 %v234
  %v305 = vpop.f32.mrf.mxu0
  %v306 = vadd.f32 %v226, %v305
  %v307 = vpop.f32.mrf.mxu0
  %308 = vmatprep.mubr.f32.mxu0 0.0
  %309 = vmatmul.mubr.f32.gmra.mxu0 %v237
  %v310 = vpop.f32.mrf.mxu0
  %v311 = vadd.f32 %v231, %v310
  %v312 = vpop.f32.mrf.mxu0
  %313 = vdwg.mxu0
  %v314 = vmul.f32 %v306, 0.5
  %v315 = vmul.f32 %v311, 0.5
  %v316 = vmul.f32 %v306, 0.70710677
  %v317 = vmul.f32 %v311, 0.70710677
  %v318 = verf.f32.pop %v316
  %v319 = verf.f32.pop %v317
  %v320 = vadd.f32 %v318, 1.0
  %v321 = vadd.f32 %v319, 1.0
  %v322 = vmul.f32 %v314, %v320
  %v323 = vmul.f32 %v315, %v321
  %325 = vset.pattern.permute.xlu0 0
  %326 = vperm.xlu0 %325, %v221
  %v327 = vpop.permute.xlu0 %326
  %330 = vset.pattern.permute.xlu0 0
  %331 = vperm.xlu0 %330, %v222
  %v332 = vpop.permute.xlu0 %331
  %vm334 = vcmask 130048
  %v336 = vsel %vm334, %v219, 0
  %v339 = vsel %vm334, %v220, 0
  %341 = vmatprep.subr.mxu0 0.0
  %342 = vmatpush1.msra.mxu0 0.0
  %343 = vmatprep.subr.mxu0 0.0
  %344 = vmatpush1.msra.mxu0 0.0
  %345 = vmatprep.subr.mxu0 0.0
  %346 = vmatpush1.msra.mxu0 0.0
  %347 = vmatprep.subr.mxu0 0.0
  %348 = vmatpush1.msra.mxu0 0.0
  %349 = vmatprep.subr.mxu0 0.0
  %350 = vmatpush1.msra.mxu0 0.0
  %351 = vmatprep.subr.mxu0 0.0
  %352 = vmatpush1.msra.mxu0 0.0
  %353 = vmatprep.subr.mxu0 0.0
  %354 = vmatpush1.msra.mxu0 0.0
  %355 = vmatprep.subr.mxu0 0.0
  %356 = vmatpush1.msra.mxu0 0.0
  %357 = vmatprep.subr.mxu0 0.0
  %358 = vmatpush1.msra.mxu0 0.0
  %359 = vmatprep.subr.mxu0 0.0
  %360 = vmatpush1.msra.mxu0 0.0
  %361 = vmatprep.subr.mxu0 0.0
  %362 = vmatpush1.msra.mxu0 0.0
  %363 = vmatprep.subr.mxu0 0.0
  %364 = vmatpush1.msra.mxu0 0.0
  %365 = vmatprep.subr.mxu0 0.0
  %366 = vmatpush1.msra.mxu0 0.0
  %367 = vmatprep.subr.mxu0 0.0
  %368 = vmatpush1.msra.mxu0 0.0
  %369 = vmatprep.subr.mxu0 0.0
  %370 = vmatpush1.msra.mxu0 %v323
  %371 = vmatprep.subr.mxu0 0.0
  %372 = vmatpush1.msra.mxu0 %v322
  %373 = vmatprep.subr.mxu0 0.0
  %374 = vmatpush2.msra.mxu0 0.0
  %375 = vmatprep.subr.mxu0 0.0
  %376 = vmatpush2.msra.mxu0 0.0
  %377 = vmatprep.subr.mxu0 0.0
  %378 = vmatpush2.msra.mxu0 0.0
  %379 = vmatprep.subr.mxu0 0.0
  %380 = vmatpush2.msra.mxu0 0.0
  %381 = vmatprep.subr.mxu0 0.0
  %382 = vmatpush2.msra.mxu0 0.0
  %383 = vmatprep.subr.mxu0 0.0
  %384 = vmatpush2.msra.mxu0 0.0
  %385 = vmatprep.subr.mxu0 0.0
  %386 = vmatpush2.msra.mxu0 0.0
  %387 = vmatprep.subr.mxu0 0.0
  %388 = vmatpush2.msra.mxu0 0.0
  %389 = vmatprep.subr.mxu0 0.0
  %390 = vmatpush2.msra.mxu0 0.0
  %391 = vmatprep.subr.mxu0 0.0
  %392 = vmatpush2.msra.mxu0 0.0
  %393 = vmatprep.subr.mxu0 0.0
  %394 = vmatpush2.msra.mxu0 0.0
  %395 = vmatprep.subr.mxu0 0.0
  %396 = vmatpush2.msra.mxu0 0.0
  %397 = vmatprep.subr.mxu0 0.0
  %398 = vmatpush2.msra.mxu0 0.0
  %399 = vmatprep.subr.mxu0 0.0
  %400 = vmatpush2.msra.mxu0 0.0
  %401 = vmatprep.subr.mxu0 0.0
  %402 = vmatpush2.msra.mxu0 0.0
  %403 = vmatprep.subr.mxu0 0.0
  %404 = vmatpush2.msra.mxu0 0.0
  %405 = vmatprep.mubr.f32.mxu0 0.0
  %406 = vmatmul.mubr.f32.gmra.mxu0 %v336
  %v407 = vpop.f32.mrf.mxu0
  %v408 = vadd.f32 %v327, %v407
  %v409 = vpop.f32.mrf.mxu0
  %410 = vmatprep.mubr.f32.mxu0 0.0
  %411 = vmatmul.mubr.f32.gmra.mxu0 %v339
  %v412 = vpop.f32.mrf.mxu0
  %v413 = vadd.f32 %v332, %v412
  %v414 = vpop.f32.mrf.mxu0
  %415 = vdwg.mxu0
  %v416 = vld [vmem:[%s2] sm:$0xff]
  %v417 = vld [vmem:[%s2 + $0x8] sm:$0xff]
  %v418 = vadd.f32 %v416, %v408
  %v419 = vadd.f32 %v417, %v413
  %420 = vst.msk [vmem:[%s12] sm:$0xff] %vm138, %v418
  %421 = vst.msk [vmem:[%s12 + $0x8] sm:$0xff] %vm138, %v419
  // Predicated region
  $region46: #{tpu_custom_call.1} parent=0 // pred_check
    _
  $region47: #{tpu_custom_call.1} parent=0 // pred_check_branch
    %423 = sbr.rel (0) target = $region49
  $region48: #{tpu_custom_call.1} parent=0 // pred_region
    _
  $region49: #{tpu_custom_call.1} parent=0 // pred_fallthru
    _
  // Predicated region
  $region50: #{tpu_custom_call.1} parent=0 // pred_check
    _
  $region51: #{tpu_custom_call.1} parent=0 // pred_check_branch
    %425 = sbr.rel (0) target = $region53
  $region52: #{tpu_custom_call.1} parent=0 // pred_region
    _
  $region53: #{tpu_custom_call.1} parent=0 // pred_fallthru
    _
  // Predicated region
  $region54: #{tpu_custom_call.1} parent=0 // pred_check
    _
  $region55: #{tpu_custom_call.1} parent=0 // pred_check_branch
    %427 = sbr.rel (0) target = $region57
  $region56: #{tpu_custom_call.1} parent=0 // pred_region
    _
  $region57: #{tpu_custom_call.1} parent=0 // pred_fallthru
    _
  // Predicated region
  $region58: #{tpu_custom_call.1} parent=0 // pred_check
    _
  $region59: #{tpu_custom_call.1} parent=0 // pred_check_branch
    %429 = sbr.rel (0) target = $region61
  $region60: #{tpu_custom_call.1} parent=0 // pred_region
    _
  $region61: #{tpu_custom_call.1} parent=0 // pred_fallthru
    _

</llo_original>
